<compile_context>
chip_gen: v7x
topology: tpu7x:2x2x1
jax: 0.10.0
libtpu: 0.0.40
codegen_flags: <defaults>
</compile_context>

<pallas_src>
import jax
import jax.numpy as jnp
from jax.experimental import pallas as pl
from jax.experimental.pallas import tpu as pltpu

N_INPUT = 32
N_CLASSES = 8
H1 = 100
H2 = 10

LANE = 128          # TPU lane width; hidden feature dims are padded to this
TILE_B_MAX = 2048   # rows per grid step; tiles stay far below scoped VMEM


def _round_up(n, m):
    return (n + m - 1) // m * m


def _cdiv(a, b):
    return (a + b - 1) // b


def _choose_tile_b(B):
    """Batch tile: full extent for tiny B, 16-row granularity (bf16 sublane
    packing) below 128, 128-row MXU-full passes above, and >= 2 grid steps
    once B >= 256 so the v7x megacore can split the batch."""
    if B <= 16:
        return B                                # block == full array extent
    if B < 128:
        return (B // 16) * 16                   # partial edge block handles the rest
    if B < 256:
        return 128
    return min(TILE_B_MAX, _round_up(_cdiv(B, 2), 128))


def mlp_kernel(x_ref, w1_ref, b1_ref, w2_ref, b2_ref, w3_ref, b3_ref, o_ref):
    # Fused 3-layer MLP on one (tile_b, N_INPUT) row block; weights stay resident.
    # bf16 matmul operands, f32 accumulation / bias / ReLU.
    x = x_ref[...]                                                      # (tb, 32) bf16

    # Layer 1: (tb, 32) @ (32, 128) + (1, 128), ReLU
    h1 = jnp.dot(x, w1_ref[...], preferred_element_type=jnp.float32) + b1_ref[...]
    h1 = jnp.maximum(h1, 0.0)

    # Layer 2: (tb, 128) @ (128, 128) + (1, 128), ReLU
    h2 = jnp.dot(h1.astype(w2_ref.dtype), w2_ref[...],
                 preferred_element_type=jnp.float32) + b2_ref[...]
    h2 = jnp.maximum(h2, 0.0)

    # Layer 3: (tb, 128) @ (128, 128) + (1, 128)   (no activation)
    out = jnp.dot(h2.astype(w3_ref.dtype), w3_ref[...],
                  preferred_element_type=jnp.float32) + b3_ref[...]     # (tb, 128) f32

    # Compact store: only the 8 real logits (masked 8-lane store, hidden under MXU).
    o_ref[...] = out[:, :N_CLASSES].astype(o_ref.dtype)


def prep_params(params):
    """One-time prep: transpose PyTorch-convention weights to (in, out),
    zero-pad feature dims to 128 lanes, cast weights to bf16 (MXU operands).
    Biases stay f32 (added to the f32 accumulator)."""

    def pad2(w, rows, cols):
        r, c = w.shape
        return jnp.pad(w, ((0, rows - r), (0, cols - c)))

    def pad1(b, cols):
        return jnp.pad(b, (0, cols - b.shape[0]))[None, :]

    w1 = pad2(params["w1"].T, N_INPUT, LANE).astype(jnp.bfloat16)   # (32, 128)
    b1 = pad1(params["b1"], LANE).astype(jnp.float32)               # (1, 128)
    w2 = pad2(params["w2"].T, LANE, LANE).astype(jnp.bfloat16)      # (128, 128)
    b2 = pad1(params["b2"], LANE).astype(jnp.float32)               # (1, 128)
    w3 = pad2(params["w3"].T, LANE, LANE).astype(jnp.bfloat16)      # (128, 128)
    b3 = pad1(params["b3"], LANE).astype(jnp.float32)               # (1, 128)
    return (w1, b1, w2, b2, w3, b3)


@jax.jit
def mlp_forward(x, prepped):
    """x: (B, N_INPUT) float32. prepped: output of prep_params."""
    w1, b1, w2, b2, w3, b3 = prepped
    B = x.shape[0]

    # bf16 MXU operands; in a real pipeline this cast fuses into x's producer.
    x = x.astype(jnp.bfloat16)

    tile_b = _choose_tile_b(B)
    grid = (_cdiv(B, tile_b),)   # partial last block is masked by Pallas — no jnp.pad

    const = lambda a: pl.BlockSpec(a.shape, lambda i: (0,) * a.ndim)

    flops = 2 * B * (N_INPUT * LANE + LANE * LANE + LANE * LANE)
    bytes_accessed = (B * N_INPUT * 2 + B * N_CLASSES * 4
                      + (w1.size + w2.size + w3.size) * 2
                      + (b1.size + b2.size + b3.size) * 4)

    return pl.pallas_call(
        mlp_kernel,
        out_shape=jax.ShapeDtypeStruct((B, N_CLASSES), jnp.float32),
        grid=grid,
        in_specs=[
            pl.BlockSpec((tile_b, N_INPUT), lambda i: (i, 0)),   # x row block
            const(w1), const(b1),
            const(w2), const(b2),
            const(w3), const(b3),
        ],
        out_specs=pl.BlockSpec((tile_b, N_CLASSES), lambda i: (i, 0)),  # compact (tb, 8)
        compiler_params=pltpu.CompilerParams(
            dimension_semantics=("parallel",),
        ),
        cost_estimate=pl.CostEstimate(
            flops=flops, transcendentals=0, bytes_accessed=bytes_accessed),
    )(x, w1, b1, w2, b2, w3, b3)


def init_params(key):
    """Deterministic init mimicking nn.Linear (uniform +-1/sqrt(fan_in)),
    stored in PyTorch convention: w (out, in), b (out,)."""
    ks = jax.random.split(key, 6)

    def lin(kw, kb, fan_in, fan_out):
        bound = 1.0 / jnp.sqrt(fan_in)
        w = jax.random.uniform(kw, (fan_out, fan_in), jnp.float32, -bound, bound)
        b = jax.random.uniform(kb, (fan_out,), jnp.float32, -bound, bound)
        return w, b

    w1, b1 = lin(ks[0], ks[1], N_INPUT, H1)
    w2, b2 = lin(ks[2], ks[3], H1, H2)
    w3, b3 = lin(ks[4], ks[5], H2, N_CLASSES)
    return {"w1": w1, "b1": b1, "w2": w2, "b2": b2, "w3": w3, "b3": b3}


if __name__ == "__main__":
    key = jax.random.PRNGKey(0)
    k_param, k_x = jax.random.split(key)

    params = init_params(k_param)
    prepped = prep_params(params)  # one-time transpose + lane padding + bf16 cast

    x = jax.random.normal(k_x, (8, N_INPUT), jnp.float32)  # small demo batch

    out = mlp_forward(x, prepped)
    out = jax.block_until_ready(out)

    # Reference check in plain JAX (f32, PyTorch-convention math). Tolerance is
    # relaxed because the kernel's matmul operands are bf16 (f32 accumulation).
    h1 = jnp.maximum(x @ params["w1"].T + params["b1"], 0.0)
    h2 = jnp.maximum(h1 @ params["w2"].T + params["b2"], 0.0)
    ref = h2 @ params["w3"].T + params["b3"]
    assert out.shape == (8, N_CLASSES)
    assert jnp.allclose(out, ref, atol=2e-2, rtol=2e-2)

    print("KERNEL_OK")
</pallas_src>

<mosaic_0001>
module attributes {stable_mosaic.version = 11 : i64} {
  func.func @mlp_kernel(%arg0: i32, %arg1: memref<8x32xbf16, #tpu.memory_space<vmem>>, %arg2: memref<32x128xbf16, #tpu.memory_space<vmem>>, %arg3: memref<1x128xf32, #tpu.memory_space<vmem>>, %arg4: memref<128x128xbf16, #tpu.memory_space<vmem>>, %arg5: memref<1x128xf32, #tpu.memory_space<vmem>>, %arg6: memref<128x128xbf16, #tpu.memory_space<vmem>>, %arg7: memref<1x128xf32, #tpu.memory_space<vmem>>, %arg8: memref<8x8xf32, #tpu.memory_space<vmem>>) attributes {dimension_semantics = [#tpu.dimension_semantics<parallel>], iteration_bounds = array<i64: 1>, scalar_prefetch = 0 : i64, scratch_operands = 0 : i64, tpu.core_type = #tpu.core_type<tc>, window_params = [{transform_indices = @transform_0, window_bounds = array<i64: 8, 32>}, {pipeline_mode = #tpu.pipeline_mode<synchronous>, transform_indices = @transform_1, window_bounds = array<i64: 32, 128>}, {pipeline_mode = #tpu.pipeline_mode<synchronous>, transform_indices = @transform_2, window_bounds = array<i64: 1, 128>}, {pipeline_mode = #tpu.pipeline_mode<synchronous>, transform_indices = @transform_3, window_bounds = array<i64: 128, 128>}, {pipeline_mode = #tpu.pipeline_mode<synchronous>, transform_indices = @transform_4, window_bounds = array<i64: 1, 128>}, {pipeline_mode = #tpu.pipeline_mode<synchronous>, transform_indices = @transform_5, window_bounds = array<i64: 128, 128>}, {pipeline_mode = #tpu.pipeline_mode<synchronous>, transform_indices = @transform_6, window_bounds = array<i64: 1, 128>}, {transform_indices = @transform_7, window_bounds = array<i64: 8, 8>}]} {
    %c0 = arith.constant 0 : index
    %c0_0 = arith.constant 0 : index
    %0 = vector.load %arg1[%c0, %c0_0] : memref<8x32xbf16, #tpu.memory_space<vmem>>, vector<8x32xbf16>
    %c0_1 = arith.constant 0 : index
    %c0_2 = arith.constant 0 : index
    %1 = vector.load %arg2[%c0_1, %c0_2] : memref<32x128xbf16, #tpu.memory_space<vmem>>, vector<32x128xbf16>
    %cst = arith.constant dense<0.000000e+00> : vector<8x128xf32>
    %2 = tpu.matmul %0, %1, %cst {dimension_numbers = #tpu.dot_dimension_numbers<[1], [0], [0], [1], [0, 0, 1, 1], [], []>} : vector<8x32xbf16>, vector<32x128xbf16>, vector<8x128xf32> -> vector<8x128xf32>
    %c0_3 = arith.constant 0 : index
    %c0_4 = arith.constant 0 : index
    %3 = vector.load %arg3[%c0_3, %c0_4] : memref<1x128xf32, #tpu.memory_space<vmem>>, vector<1x128xf32>
    %4 = vector.broadcast %3 : vector<1x128xf32> to vector<8x128xf32>
    %5 = arith.addf %2, %4 : vector<8x128xf32>
    %cst_5 = arith.constant 0.000000e+00 : f32
    %6 = vector.broadcast %cst_5 : f32 to vector<8x128xf32>
    %7 = arith.maximumf %5, %6 : vector<8x128xf32>
    %8 = arith.truncf %7 : vector<8x128xf32> to vector<8x128xbf16>
    %c0_6 = arith.constant 0 : index
    %c0_7 = arith.constant 0 : index
    %9 = vector.load %arg4[%c0_6, %c0_7] : memref<128x128xbf16, #tpu.memory_space<vmem>>, vector<128x128xbf16>
    %cst_8 = arith.constant dense<0.000000e+00> : vector<8x128xf32>
    %10 = tpu.matmul %8, %9, %cst_8 {dimension_numbers = #tpu.dot_dimension_numbers<[1], [0], [0], [1], [0, 0, 1, 1], [], []>} : vector<8x128xbf16>, vector<128x128xbf16>, vector<8x128xf32> -> vector<8x128xf32>
    %c0_9 = arith.constant 0 : index
    %c0_10 = arith.constant 0 : index
    %11 = vector.load %arg5[%c0_9, %c0_10] : memref<1x128xf32, #tpu.memory_space<vmem>>, vector<1x128xf32>
    %12 = vector.broadcast %11 : vector<1x128xf32> to vector<8x128xf32>
    %13 = arith.addf %10, %12 : vector<8x128xf32>
    %cst_11 = arith.constant 0.000000e+00 : f32
    %14 = vector.broadcast %cst_11 : f32 to vector<8x128xf32>
    %15 = arith.maximumf %13, %14 : vector<8x128xf32>
    %16 = arith.truncf %15 : vector<8x128xf32> to vector<8x128xbf16>
    %c0_12 = arith.constant 0 : index
    %c0_13 = arith.constant 0 : index
    %17 = vector.load %arg6[%c0_12, %c0_13] : memref<128x128xbf16, #tpu.memory_space<vmem>>, vector<128x128xbf16>
    %cst_14 = arith.constant dense<0.000000e+00> : vector<8x128xf32>
    %18 = tpu.matmul %16, %17, %cst_14 {dimension_numbers = #tpu.dot_dimension_numbers<[1], [0], [0], [1], [0, 0, 1, 1], [], []>} : vector<8x128xbf16>, vector<128x128xbf16>, vector<8x128xf32> -> vector<8x128xf32>
    %c0_15 = arith.constant 0 : index
    %c0_16 = arith.constant 0 : index
    %19 = vector.load %arg7[%c0_15, %c0_16] : memref<1x128xf32, #tpu.memory_space<vmem>>, vector<1x128xf32>
    %20 = vector.broadcast %19 : vector<1x128xf32> to vector<8x128xf32>
    %21 = arith.addf %18, %20 : vector<8x128xf32>
    %22 = vector.extract_strided_slice %21 {offsets = [0, 0], sizes = [8, 8], strides = [1, 1]} : vector<8x128xf32> to vector<8x8xf32>
    %c0_17 = arith.constant 0 : index
    %c0_18 = arith.constant 0 : index
    %23 = vector.load %arg8[%c0_17, %c0_18] : memref<8x8xf32, #tpu.memory_space<vmem>>, vector<8x8xf32>
    tpu.vector_store %arg8[%c0_17, %c0_18], %22 {strides = array<i32>} : memref<8x8xf32, #tpu.memory_space<vmem>>, vector<8x8xf32>,
    return
  }
  func.func @transform_0(%arg0: i32) -> (i32, i32) {
    %c0_i32 = arith.constant 0 : i32
    %c0_i32_0 = arith.constant 0 : i32
    return %arg0, %c0_i32 : i32, i32
  }
  func.func @transform_1(%arg0: i32) -> (i32, i32) {
    %c0_i32 = arith.constant 0 : i32
    %c0_i32_0 = arith.constant 0 : i32
    %c0_i32_1 = arith.constant 0 : i32
    return %c0_i32, %c0_i32_0 : i32, i32
  }
  func.func @transform_2(%arg0: i32) -> (i32, i32) {
    %c0_i32 = arith.constant 0 : i32
    %c0_i32_0 = arith.constant 0 : i32
    %c0_i32_1 = arith.constant 0 : i32
    return %c0_i32, %c0_i32_0 : i32, i32
  }
  func.func @transform_3(%arg0: i32) -> (i32, i32) {
    %c0_i32 = arith.constant 0 : i32
    %c0_i32_0 = arith.constant 0 : i32
    %c0_i32_1 = arith.constant 0 : i32
    return %c0_i32, %c0_i32_0 : i32, i32
  }
  func.func @transform_4(%arg0: i32) -> (i32, i32) {
    %c0_i32 = arith.constant 0 : i32
    %c0_i32_0 = arith.constant 0 : i32
    %c0_i32_1 = arith.constant 0 : i32
    return %c0_i32, %c0_i32_0 : i32, i32
  }
  func.func @transform_5(%arg0: i32) -> (i32, i32) {
    %c0_i32 = arith.constant 0 : i32
    %c0_i32_0 = arith.constant 0 : i32
    %c0_i32_1 = arith.constant 0 : i32
    return %c0_i32, %c0_i32_0 : i32, i32
  }
  func.func @transform_6(%arg0: i32) -> (i32, i32) {
    %c0_i32 = arith.constant 0 : i32
    %c0_i32_0 = arith.constant 0 : i32
    %c0_i32_1 = arith.constant 0 : i32
    return %c0_i32, %c0_i32_0 : i32, i32
  }
  func.func @transform_7(%arg0: i32) -> (i32, i32) {
    %c0_i32 = arith.constant 0 : i32
    %c0_i32_0 = arith.constant 0 : i32
    return %arg0, %c0_i32 : i32, i32
  }
}

</mosaic_0001>

<llo_original>
// kernel: mlp_forward.1
$region0: #{mlp_forward.1}
  #allocation0 [shape = 'u32[]', space=smem, size = 0x4, offset = 0x4, fixed_abs, tag = 'smem constant byte address 0x4 - core index']
  #allocation1 [shape = 'u32[144,128]{1,0:T(1,128)}', space=vmem, size = 0x12000, scoped, tag = 'internal scratch']
  %s0 = inlined_call_operand.vmem [shape: bf16[8,32], index: 0, kind: input, shape index: {}]
  %s1 = inlined_call_operand.hbm [shape: bf16[32,128], index: 1, kind: input, shape index: {}]
  %s2 = inlined_call_operand.vmem [shape: f32[1,128], index: 2, kind: input, shape index: {}]
  %s3 = inlined_call_operand.hbm [shape: bf16[128,128], index: 3, kind: input, shape index: {}]
  %s4 = inlined_call_operand.vmem [shape: f32[1,128], index: 4, kind: input, shape index: {}]
  %s5 = inlined_call_operand.hbm [shape: bf16[128,128], index: 5, kind: input, shape index: {}]
  %s6 = inlined_call_operand.vmem [shape: f32[1,128], index: 6, kind: input, shape index: {}]
  %s7 = inlined_call_operand.hbm [shape: f32[8,8], index: 7, kind: output, shape index: {}]
  %s8 = sld [smem:[#allocation0]]
  $region50: #{mlp_forward.1} parent=0
    _
  %s10 = ssub.s32 1, %s8
  %s11 = scalar_select 0, %s10, %s8
  $region1: #{mlp_forward.1} parent=0
    #allocation2 [shape = 'u8[8192]{0}', space=vmem, size = 0x2000, scoped, tag = 'input window, operand 1, single buffered']
    #allocation3 [shape = 's32[1]{0}', space=sflag, size = 0x4, scoped, tag = 'scoped memory for mlp_forward.1']
    #allocation4 [shape = 's32[1]{0}', space=sflag, size = 0x4, scoped, tag = 'scoped memory for mlp_forward.1']
    #allocation5 [shape = 'u8[32768]{0}', space=vmem, size = 0x8000, scoped, tag = 'input window, operand 3, single buffered']
    #allocation6 [shape = 's32[1]{0}', space=sflag, size = 0x4, scoped, tag = 'scoped memory for mlp_forward.1']
    #allocation7 [shape = 'u8[32768]{0}', space=vmem, size = 0x8000, scoped, tag = 'input window, operand 5, single buffered']
    #allocation8 [shape = 'u8[4096]{0}', space=vmem, size = 0x1000, scoped, tag = 'output window, operand 0, single buffered']
    %12 = vsyncpa [#allocation3], 0
    %13 = vsyncpa [#allocation6], 0
    %14 = vsyncpa [#allocation4], 0
    // Predicated region
    $region2: #{mlp_forward.1} parent=1 // pred_check
      _
    $region3: #{mlp_forward.1} parent=1 // pred_check_branch
      %16 = sbr.rel (0) target = $region5
    $region4: #{mlp_forward.1} parent=1 // pred_region
      _
    $region5: #{mlp_forward.1} parent=1 // pred_fallthru
      _
    // Predicated region
    $region6: #{mlp_forward.1} parent=1 // pred_check
      _
    $region7: #{mlp_forward.1} parent=1 // pred_check_branch
      %18 = sbr.rel (0) target = $region9
    $region8: #{mlp_forward.1} parent=1 // pred_region
      %s20 = ssub.s32 256, 256
      %21 = vsyncadd [#allocation3], %s20
      %s22 = sshll.u32 [#allocation2], 4
      %s23 = int_to_ptr.vmem [resolvable:$true] %s22
      %28 = dma.hbm_to_vmem [thread:$0]  %s1, 256, %s23, [#allocation3], 64, 64, 4
    $region9: #{mlp_forward.1} parent=1 // pred_fallthru
      _
    // Predicated region
    $region10: #{mlp_forward.1} parent=1 // pred_check
      _
    $region11: #{mlp_forward.1} parent=1 // pred_check_branch
      %30 = sbr.rel (0) target = $region13
    $region12: #{mlp_forward.1} parent=1 // pred_region
      _
    $region13: #{mlp_forward.1} parent=1 // pred_fallthru
      _
    // Predicated region
    $region14: #{mlp_forward.1} parent=1 // pred_check
      _
    $region15: #{mlp_forward.1} parent=1 // pred_check_branch
      %32 = sbr.rel (0) target = $region17
    $region16: #{mlp_forward.1} parent=1 // pred_region
      %s34 = ssub.s32 1024, 1024
      %35 = vsyncadd [#allocation6], %s34
      %s36 = sshll.u32 [#allocation5], 4
      %s37 = int_to_ptr.vmem [resolvable:$true] %s36
      %42 = dma.hbm_to_vmem [thread:$0]  %s3, 1024, %s37, [#allocation6], 64, 64, 4
    $region17: #{mlp_forward.1} parent=1 // pred_fallthru
      _
    // Predicated region
    $region18: #{mlp_forward.1} parent=1 // pred_check
      _
    $region19: #{mlp_forward.1} parent=1 // pred_check_branch
      %44 = sbr.rel (0) target = $region21
    $region20: #{mlp_forward.1} parent=1 // pred_region
      _
    $region21: #{mlp_forward.1} parent=1 // pred_fallthru
      _
    // Predicated region
    $region22: #{mlp_forward.1} parent=1 // pred_check
      _
    $region23: #{mlp_forward.1} parent=1 // pred_check_branch
      %46 = sbr.rel (0) target = $region25
    $region24: #{mlp_forward.1} parent=1 // pred_region
      %s48 = ssub.s32 1024, 1024
      %49 = vsyncadd [#allocation6], %s48
      %s50 = sshll.u32 [#allocation7], 4
      %s51 = int_to_ptr.vmem [resolvable:$true] %s50
      %56 = dma.hbm_to_vmem [thread:$0]  %s5, 1024, %s51, [#allocation6], 64, 64, 4
    $region25: #{mlp_forward.1} parent=1 // pred_fallthru
      _
    // Predicated region
    $region26: #{mlp_forward.1} parent=1 // pred_check
      _
    $region27: #{mlp_forward.1} parent=1 // pred_check_branch
      %58 = sbr.rel (0) target = $region29
    $region28: #{mlp_forward.1} parent=1 // pred_region
      _
    $region29: #{mlp_forward.1} parent=1 // pred_fallthru
      _
    // Predicated region
    $region30: #{mlp_forward.1} parent=1 // pred_check
      _
    $region31: #{mlp_forward.1} parent=1 // pred_check_branch
      %60 = sbr.rel (0) target = $region33
    $region32: #{mlp_forward.1} parent=1 // pred_region
      %61 = dma.done [#allocation3], 256
    $region33: #{mlp_forward.1} parent=1 // pred_fallthru
      _
    // Predicated region
    $region34: #{mlp_forward.1} parent=1 // pred_check
      _
    $region35: #{mlp_forward.1} parent=1 // pred_check_branch
      %63 = sbr.rel (0) target = $region37
    $region36: #{mlp_forward.1} parent=1 // pred_region
      %64 = dma.done [#allocation6], 1024
    $region37: #{mlp_forward.1} parent=1 // pred_fallthru
      _
    // Predicated region
    $region38: #{mlp_forward.1} parent=1 // pred_check
      _
    $region39: #{mlp_forward.1} parent=1 // pred_check_branch
      %66 = sbr.rel (0) target = $region41
    $region40: #{mlp_forward.1} parent=1 // pred_region
      %67 = dma.done [#allocation6], 1024
    $region41: #{mlp_forward.1} parent=1 // pred_fallthru
      _
    %v69 = vld [vmem:[%s0] sm:$0xf]
    %v70 = vld [vmem:[#allocation2] sm:$0xf]
    %v71 = vld [vmem:[#allocation2 + $0x4] sm:$0xf]
    %v72 = vld [vmem:[#allocation2 + $0x8] sm:$0xf]
    %v73 = vld [vmem:[#allocation2 + $0xc] sm:$0xf]
    %v74 = vld [vmem:[%s2] sm:$0x1]
    %v76 = vlaneseq
    %v77 = vshrl.u32 %v76, 7
    %v78 = vsub.s32 0, %v77
    %v79 = vrot.slane %v74, %v78
    %v85 = vunpack.c.l.b16 %v70
    %v86 = vunpack.c.l.b16 %v71
    %v87 = vunpack.c.l.b16 %v72
    %v88 = vunpack.c.l.b16 %v73
    %v89 = vpack.c.b16 %v86, %v85
    %v90 = vpack.c.b16 %v88, %v87
    %vm93 = vcmask 261120
    %v95 = vsel %vm93, %v69, 0
    %97 = vmatprep.subr.bf16.mxu0 0
    %98 = vmatpush1.bf16.msra.mxu0 %v89
    %99 = vmatprep.subr.bf16.mxu0 0
    %100 = vmatpush1.bf16.msra.mxu0 %v90
    %101 = vmatprep.subr.bf16.mxu0 0
    %102 = vmatpush1.bf16.msra.mxu0 0
    %103 = vmatprep.subr.bf16.mxu0 0
    %104 = vmatpush1.bf16.msra.mxu0 0
    %105 = vmatprep.subr.bf16.mxu0 0
    %106 = vmatpush1.bf16.msra.mxu0 0
    %107 = vmatprep.subr.bf16.mxu0 0
    %108 = vmatpush1.bf16.msra.mxu0 0
    %109 = vmatprep.subr.bf16.mxu0 0
    %110 = vmatpush1.bf16.msra.mxu0 0
    %111 = vmatprep.subr.bf16.mxu0 0
    %112 = vmatpush1.bf16.msra.mxu0 0
    %113 = vmatprep.subr.bf16.mxu0 0
    %114 = vmatpush1.bf16.msra.mxu0 0
    %115 = vmatprep.subr.bf16.mxu0 0
    %116 = vmatpush1.bf16.msra.mxu0 0
    %117 = vmatprep.subr.bf16.mxu0 0
    %118 = vmatpush1.bf16.msra.mxu0 0
    %119 = vmatprep.subr.bf16.mxu0 0
    %120 = vmatpush1.bf16.msra.mxu0 0
    %121 = vmatprep.subr.bf16.mxu0 0
    %122 = vmatpush1.bf16.msra.mxu0 0
    %123 = vmatprep.subr.bf16.mxu0 0
    %124 = vmatpush1.bf16.msra.mxu0 0
    %125 = vmatprep.subr.bf16.mxu0 0
    %126 = vmatpush1.bf16.msra.mxu0 0
    %127 = vmatprep.subr.bf16.mxu0 0
    %128 = vmatpush1.bf16.msra.mxu0 0
    %129 = vmatprep.mubr.bf16.mxu0 0
    %130 = vmatmul.mubr.bf16.gmra.mrb[0].mxu0 %v95
    %v131 = vpop.f32.mrb[0].mxu0
    %v132 = vadd.f32 %v79, %v131
    %v133 = vpop.f32.mrb[0].mxu0
    %v134 = vpop.f32.mrb[0].mxu0
    %v135 = vpop.f32.mrb[0].mxu0
    %136 = vdwg.mxu0
    %v137 = vmax.f32 %v132, 0.0
    %v138 = vpack.c.bf16 %v137, %v137
    %v139 = vld [vmem:[#allocation5] sm:$0xf]
    %v140 = vld [vmem:[#allocation5 + $0x4] sm:$0xf]
    %v141 = vld [vmem:[#allocation5 + $0x8] sm:$0xf]
    %v142 = vld [vmem:[#allocation5 + $0xc] sm:$0xf]
    %v143 = vld [vmem:[#allocation5 + $0x10] sm:$0xf]
    %v144 = vld [vmem:[#allocation5 + $0x14] sm:$0xf]
    %v145 = vld [vmem:[#allocation5 + $0x18] sm:$0xf]
    %v146 = vld [vmem:[#allocation5 + $0x1c] sm:$0xf]
    %v147 = vld [vmem:[#allocation5 + $0x20] sm:$0xf]
    %v148 = vld [vmem:[#allocation5 + $0x24] sm:$0xf]
    %v149 = vld [vmem:[#allocation5 + $0x28] sm:$0xf]
    %v150 = vld [vmem:[#allocation5 + $0x2c] sm:$0xf]
    %v151 = vld [vmem:[#allocation5 + $0x30] sm:$0xf]
    %v152 = vld [vmem:[#allocation5 + $0x34] sm:$0xf]
    %v153 = vld [vmem:[#allocation5 + $0x38] sm:$0xf]
    %v154 = vld [vmem:[#allocation5 + $0x3c] sm:$0xf]
    %v155 = vld [vmem:[%s4] sm:$0x1]
    %v157 = vlaneseq
    %v158 = vshrl.u32 %v157, 7
    %v159 = vsub.s32 0, %v158
    %v160 = vrot.slane %v155, %v159
    %v178 = vunpack.c.l.b16 %v139
    %v179 = vunpack.c.l.b16 %v140
    %v180 = vunpack.c.l.b16 %v141
    %v181 = vunpack.c.l.b16 %v142
    %v182 = vunpack.c.l.b16 %v143
    %v183 = vunpack.c.l.b16 %v144
    %v184 = vunpack.c.l.b16 %v145
    %v185 = vunpack.c.l.b16 %v146
    %v186 = vunpack.c.l.b16 %v147
    %v187 = vunpack.c.l.b16 %v148
    %v188 = vunpack.c.l.b16 %v149
    %v189 = vunpack.c.l.b16 %v150
    %v190 = vunpack.c.l.b16 %v151
    %v191 = vunpack.c.l.b16 %v152
    %v192 = vunpack.c.l.b16 %v153
    %v193 = vunpack.c.l.b16 %v154
    %v194 = vpack.c.b16 %v179, %v178
    %v195 = vpack.c.b16 %v181, %v180
    %v196 = vpack.c.b16 %v183, %v182
    %v197 = vpack.c.b16 %v185, %v184
    %v198 = vpack.c.b16 %v187, %v186
    %v199 = vpack.c.b16 %v189, %v188
    %v200 = vpack.c.b16 %v191, %v190
    %v201 = vpack.c.b16 %v193, %v192
    %210 = vmatprep.subr.bf16.mxu0 0
    %211 = vmatpush1.bf16.msra.mxu0 %v194
    %212 = vmatprep.subr.bf16.mxu0 0
    %213 = vmatpush1.bf16.msra.mxu0 %v195
    %214 = vmatprep.subr.bf16.mxu0 0
    %215 = vmatpush1.bf16.msra.mxu0 %v196
    %216 = vmatprep.subr.bf16.mxu0 0
    %217 = vmatpush1.bf16.msra.mxu0 %v197
    %218 = vmatprep.subr.bf16.mxu0 0
    %219 = vmatpush1.bf16.msra.mxu0 %v198
    %220 = vmatprep.subr.bf16.mxu0 0
    %221 = vmatpush1.bf16.msra.mxu0 %v199
    %222 = vmatprep.subr.bf16.mxu0 0
    %223 = vmatpush1.bf16.msra.mxu0 %v200
    %224 = vmatprep.subr.bf16.mxu0 0
    %225 = vmatpush1.bf16.msra.mxu0 %v201
    %226 = vmatprep.subr.bf16.mxu0 0
    %227 = vmatpush1.bf16.msra.mxu0 0
    %228 = vmatprep.subr.bf16.mxu0 0
    %229 = vmatpush1.bf16.msra.mxu0 0
    %230 = vmatprep.subr.bf16.mxu0 0
    %231 = vmatpush1.bf16.msra.mxu0 0
    %232 = vmatprep.subr.bf16.mxu0 0
    %233 = vmatpush1.bf16.msra.mxu0 0
    %234 = vmatprep.subr.bf16.mxu0 0
    %235 = vmatpush1.bf16.msra.mxu0 0
    %236 = vmatprep.subr.bf16.mxu0 0
    %237 = vmatpush1.bf16.msra.mxu0 0
    %238 = vmatprep.subr.bf16.mxu0 0
    %239 = vmatpush1.bf16.msra.mxu0 0
    %240 = vmatprep.subr.bf16.mxu0 0
    %241 = vmatpush1.bf16.msra.mxu0 0
    %242 = vmatprep.mubr.bf16.mxu0 0
    %243 = vmatmul.mubr.bf16.gmra.mrb[0].mxu0 %v138
    %v244 = vpop.f32.mrb[0].mxu0
    %v245 = vadd.f32 %v160, %v244
    %v246 = vpop.f32.mrb[0].mxu0
    %v247 = vpop.f32.mrb[0].mxu0
    %v248 = vpop.f32.mrb[0].mxu0
    %249 = vdwg.mxu0
    %v250 = vmax.f32 %v245, 0.0
    %v251 = vpack.c.bf16 %v250, %v250
    %v252 = vld [vmem:[#allocation7] sm:$0xf]
    %v253 = vld [vmem:[#allocation7 + $0x4] sm:$0xf]
    %v254 = vld [vmem:[#allocation7 + $0x8] sm:$0xf]
    %v255 = vld [vmem:[#allocation7 + $0xc] sm:$0xf]
    %v256 = vld [vmem:[#allocation7 + $0x10] sm:$0xf]
    %v257 = vld [vmem:[#allocation7 + $0x14] sm:$0xf]
    %v258 = vld [vmem:[#allocation7 + $0x18] sm:$0xf]
    %v259 = vld [vmem:[#allocation7 + $0x1c] sm:$0xf]
    %v260 = vld [vmem:[#allocation7 + $0x20] sm:$0xf]
    %v261 = vld [vmem:[#allocation7 + $0x24] sm:$0xf]
    %v262 = vld [vmem:[#allocation7 + $0x28] sm:$0xf]
    %v263 = vld [vmem:[#allocation7 + $0x2c] sm:$0xf]
    %v264 = vld [vmem:[#allocation7 + $0x30] sm:$0xf]
    %v265 = vld [vmem:[#allocation7 + $0x34] sm:$0xf]
    %v266 = vld [vmem:[#allocation7 + $0x38] sm:$0xf]
    %v267 = vld [vmem:[#allocation7 + $0x3c] sm:$0xf]
    %v268 = vld [vmem:[%s6] sm:$0x1]
    %v270 = vlaneseq
    %v271 = vshrl.u32 %v270, 7
    %v272 = vsub.s32 0, %v271
    %v273 = vrot.slane %v268, %v272
    %v291 = vunpack.c.l.b16 %v252
    %v292 = vunpack.c.l.b16 %v253
    %v293 = vunpack.c.l.b16 %v254
    %v294 = vunpack.c.l.b16 %v255
    %v295 = vunpack.c.l.b16 %v256
    %v296 = vunpack.c.l.b16 %v257
    %v297 = vunpack.c.l.b16 %v258
    %v298 = vunpack.c.l.b16 %v259
    %v299 = vunpack.c.l.b16 %v260
    %v300 = vunpack.c.l.b16 %v261
    %v301 = vunpack.c.l.b16 %v262
    %v302 = vunpack.c.l.b16 %v263
    %v303 = vunpack.c.l.b16 %v264
    %v304 = vunpack.c.l.b16 %v265
    %v305 = vunpack.c.l.b16 %v266
    %v306 = vunpack.c.l.b16 %v267
    %v307 = vpack.c.b16 %v292, %v291
    %v308 = vpack.c.b16 %v294, %v293
    %v309 = vpack.c.b16 %v296, %v295
    %v310 = vpack.c.b16 %v298, %v297
    %v311 = vpack.c.b16 %v300, %v299
    %v312 = vpack.c.b16 %v302, %v301
    %v313 = vpack.c.b16 %v304, %v303
    %v314 = vpack.c.b16 %v306, %v305
    %323 = vmatprep.subr.bf16.mxu0 0
    %324 = vmatpush1.bf16.msra.mxu0 %v307
    %325 = vmatprep.subr.bf16.mxu0 0
    %326 = vmatpush1.bf16.msra.mxu0 %v308
    %327 = vmatprep.subr.bf16.mxu0 0
    %328 = vmatpush1.bf16.msra.mxu0 %v309
    %329 = vmatprep.subr.bf16.mxu0 0
    %330 = vmatpush1.bf16.msra.mxu0 %v310
    %331 = vmatprep.subr.bf16.mxu0 0
    %332 = vmatpush1.bf16.msra.mxu0 %v311
    %333 = vmatprep.subr.bf16.mxu0 0
    %334 = vmatpush1.bf16.msra.mxu0 %v312
    %335 = vmatprep.subr.bf16.mxu0 0
    %336 = vmatpush1.bf16.msra.mxu0 %v313
    %337 = vmatprep.subr.bf16.mxu0 0
    %338 = vmatpush1.bf16.msra.mxu0 %v314
    %339 = vmatprep.subr.bf16.mxu0 0
    %340 = vmatpush1.bf16.msra.mxu0 0
    %341 = vmatprep.subr.bf16.mxu0 0
    %342 = vmatpush1.bf16.msra.mxu0 0
    %343 = vmatprep.subr.bf16.mxu0 0
    %344 = vmatpush1.bf16.msra.mxu0 0
    %345 = vmatprep.subr.bf16.mxu0 0
    %346 = vmatpush1.bf16.msra.mxu0 0
    %347 = vmatprep.subr.bf16.mxu0 0
    %348 = vmatpush1.bf16.msra.mxu0 0
    %349 = vmatprep.subr.bf16.mxu0 0
    %350 = vmatpush1.bf16.msra.mxu0 0
    %351 = vmatprep.subr.bf16.mxu0 0
    %352 = vmatpush1.bf16.msra.mxu0 0
    %353 = vmatprep.subr.bf16.mxu0 0
    %354 = vmatpush1.bf16.msra.mxu0 0
    %355 = vmatprep.mubr.bf16.mxu0 0
    %356 = vmatmul.mubr.bf16.gmra.mrb[0].mxu0 %v251
    %v357 = vpop.f32.mrb[0].mxu0
    %v358 = vadd.f32 %v273, %v357
    %v359 = vpop.f32.mrb[0].mxu0
    %v360 = vpop.f32.mrb[0].mxu0
    %v361 = vpop.f32.mrb[0].mxu0
    %362 = vdwg.mxu0
    %vm363 = vcmask 64512
    %364 = vst.msk [vmem:[#allocation8] sm:$0xff] %vm363, %v358
    // Predicated region
    $region42: #{mlp_forward.1} parent=1 // pred_check
      _
    $region43: #{mlp_forward.1} parent=1 // pred_check_branch
      %366 = sbr.rel (0) target = $region45
    $region44: #{mlp_forward.1} parent=1 // pred_region
      %s368 = ssub.s32 128, 128
      %369 = vsyncadd [#allocation4], %s368
      %s371 = sshll.u32 [#allocation8], 4
      %s372 = int_to_ptr.vmem [resolvable:$true] %s371
      %374 = dma.vmem_to_hbm [thread:$0]  %s372, 128, %s7, [#allocation4]
    $region45: #{mlp_forward.1} parent=1 // pred_fallthru
      _
    // Predicated region
    $region46: #{mlp_forward.1} parent=1 // pred_check
      _
    $region47: #{mlp_forward.1} parent=1 // pred_check_branch
      %376 = sbr.rel (0) target = $region49
    $region48: #{mlp_forward.1} parent=1 // pred_region
      %377 = dma.done [#allocation4], 128
    $region49: #{mlp_forward.1} parent=1 // pred_fallthru
      _
    %378 = vsyncpa [#allocation3], 1
    %379 = vsyncpa [#allocation6], 1
    %380 = vsyncpa [#allocation4], 1

</llo_original>
